<compile_context>
chip_gen: v7x
topology: tpu7x:2x2x1
jax: 0.10.0
libtpu: 0.0.40
codegen_flags: <defaults>
</compile_context>

<pallas_src>
import jax
import jax.numpy as jnp
from jax import lax
from jax.experimental import pallas as pl
from jax.experimental.pallas import tpu as pltpu

_VMEM = pl.BlockSpec(memory_space=pltpu.MemorySpace.VMEM)
_SMEM = pl.BlockSpec(memory_space=pltpu.MemorySpace.SMEM)


def _proj_kernel(w_ref, xt_ref, sz_ref):
    # w_ref : [2, F]  (row 0 = w_self^T, row 1 = w_neigh^T)  -- fused weights
    # xt_ref: [F, N]  (features on sublanes, nodes on lanes -> lane-dense out)
    # sz_ref: [2, N]  (row 0 = x_i.w_self, row 1 = x_i.w_neigh, per node)
    sz_ref[...] = jnp.dot(w_ref[...], xt_ref[...],
                          preferred_element_type=jnp.float32)


def _readout_kernel(b_ref, s_ref, agg_ref, batch_ref, invc_ref, out_ref):
    # b_ref    : SMEM [1, 1] bias scalar
    # s_ref    : [1, N] self term per node
    # agg_ref  : [1, N] aggregated neighbor term per node
    # batch_ref: [N, 1] int32 graph id per node
    # invc_ref : [1, G] 1 / |V_g|
    # out_ref  : [1, G] logits (lane-dense)
    n = batch_ref.shape[0]
    g = out_ref.shape[1]
    # GraphConv epilogue: self + neighbor + bias, then ReLU (all [1, N]).
    h = jnp.maximum(s_ref[...] + agg_ref[...] + b_ref[0, 0], 0.0)
    # Per-graph membership mask built in-kernel (no dense [G,N] HBM matrix).
    gid = lax.broadcasted_iota(jnp.int32, (n, g), 1)            # [N, G]
    mask = (batch_ref[...] == gid).astype(jnp.float32)          # [N, G]
    pooled = jnp.dot(h, mask, preferred_element_type=jnp.float32)  # [1, G]
    out_ref[...] = pooled * invc_ref[...]                       # mean pool


def classifier_forward(x, edge_index, x_batch, w_self, w_neigh, bias,
                       num_graphs):
    """x: [N, F] f32, edge_index: [2, E] int32, x_batch: [N] int32."""
    n, _ = x.shape

    # --- Pallas: fused, lane-dense feature projection  [2,F]@[F,N] -> [2,N].
    w_cat_t = jnp.concatenate([w_self, w_neigh], axis=1).T      # [2, F]
    xt = x.T                                                    # [F, N]
    sz = pl.pallas_call(
        _proj_kernel,
        out_shape=jax.ShapeDtypeStruct((2, n), jnp.float32),
        in_specs=[_VMEM, _VMEM],
        out_specs=_VMEM,
    )(w_cat_t, xt)

    # --- Glue: sparse neighbor aggregation on the SCALAR messages, O(E).
    # agg_i = sum_{edge (j -> i)} z_j   with z = x @ w_neigh  (row 1 of sz).
    # (replaces the dense [N,N] adjacency and its O(N^2*F) matmul)
    src, dst = edge_index[0], edge_index[1]
    z = sz[1]                                                   # [N]
    agg = jnp.zeros((n,), jnp.float32).at[dst].add(z[src])      # [N]

    # Mean-pool bookkeeping: node counts per graph, clamped to >= 1.
    counts = jnp.zeros((num_graphs,), jnp.float32).at[x_batch].add(1.0)
    inv_counts = (1.0 / jnp.maximum(counts, 1.0))[None, :]      # [1, G]

    # --- Pallas: activation + per-graph mean pool, lane-dense [1, G] output.
    out_row = pl.pallas_call(
        _readout_kernel,
        out_shape=jax.ShapeDtypeStruct((1, num_graphs), jnp.float32),
        in_specs=[_SMEM, _VMEM, _VMEM, _VMEM, _VMEM],
        out_specs=_VMEM,
    )(bias, sz[0:1, :], agg[None, :], x_batch[:, None].astype(jnp.int32),
      inv_counts)

    return out_row.reshape(num_graphs, 1)   # [G, 1], matches module output


if __name__ == "__main__":
    key = jax.random.PRNGKey(0)
    k_x, k_e, k_ws, k_wn, k_b = jax.random.split(key, 5)

    N = 16          # nodes
    F = 32          # input_dim
    E = 40          # edges
    G = 2           # graphs in the batch

    x = jax.random.normal(k_x, (N, F), dtype=jnp.float32)
    edge_index = jax.random.randint(k_e, (2, E), 0, N, dtype=jnp.int32)
    x_batch = jnp.concatenate(
        [jnp.zeros((N // 2,), jnp.int32), jnp.ones((N - N // 2,), jnp.int32)])

    # Deterministic parameter init (GraphConv: in=F, out=1).
    w_self = jax.random.normal(k_ws, (F, 1), dtype=jnp.float32) * 0.1
    w_neigh = jax.random.normal(k_wn, (F, 1), dtype=jnp.float32) * 0.1
    bias = jax.random.normal(k_b, (1, 1), dtype=jnp.float32) * 0.1

    out = classifier_forward(x, edge_index, x_batch, w_self, w_neigh, bias, G)
    jax.block_until_ready(out)
    assert out.shape == (G, 1)

    # Pure-JAX reference (dense-adjacency formulation) for a sanity check.
    adj = jnp.zeros((N, N), jnp.float32).at[edge_index[1], edge_index[0]].add(1.0)
    h_ref = jnp.maximum(x @ w_self + (adj @ x) @ w_neigh + bias[0, 0], 0.0)
    onehot = (x_batch[None, :] == jnp.arange(G)[:, None]).astype(jnp.float32)
    ref = (onehot / jnp.maximum(onehot.sum(1, keepdims=True), 1.0)) @ h_ref
    assert jnp.allclose(out, ref, atol=1e-5, rtol=1e-5)

    print("KERNEL_OK")
</pallas_src>

<mosaic_0001>
module attributes {stable_mosaic.version = 11 : i64} {
  func.func @_proj_kernel(%arg0: memref<2x32xf32, #tpu.memory_space<vmem>>, %arg1: memref<32x16xf32, #tpu.memory_space<vmem>>, %arg2: memref<2x16xf32, #tpu.memory_space<vmem>>) attributes {dimension_semantics = [], scalar_prefetch = 0 : i64, scratch_operands = 0 : i64, tpu.core_type = #tpu.core_type<tc>} {
    %c0 = arith.constant 0 : index
    %c0_0 = arith.constant 0 : index
    %0 = vector.load %arg0[%c0, %c0_0] : memref<2x32xf32, #tpu.memory_space<vmem>>, vector<2x32xf32>
    %c0_1 = arith.constant 0 : index
    %c0_2 = arith.constant 0 : index
    %1 = vector.load %arg1[%c0_1, %c0_2] : memref<32x16xf32, #tpu.memory_space<vmem>>, vector<32x16xf32>
    %cst = arith.constant dense<0.000000e+00> : vector<2x16xf32>
    %2 = tpu.matmul %0, %1, %cst {dimension_numbers = #tpu.dot_dimension_numbers<[1], [0], [0], [1], [0, 0, 1, 1], [], []>} : vector<2x32xf32>, vector<32x16xf32>, vector<2x16xf32> -> vector<2x16xf32>
    %c0_3 = arith.constant 0 : index
    %c0_4 = arith.constant 0 : index
    %3 = vector.load %arg2[%c0_3, %c0_4] : memref<2x16xf32, #tpu.memory_space<vmem>>, vector<2x16xf32>
    tpu.vector_store %arg2[%c0_3, %c0_4], %2 {strides = array<i32>} : memref<2x16xf32, #tpu.memory_space<vmem>>, vector<2x16xf32>,
    return
  }
}

</mosaic_0001>

<llo_original>
// kernel: tpu_custom_call.1
$region0: #{tpu_custom_call.1}
  #allocation0 [shape = 'u32[]', space=smem, size = 0x4, offset = 0x4, fixed_abs, tag = 'smem constant byte address 0x4 - core index']
  #allocation1 [shape = 'u32[144,128]{1,0:T(1,128)}', space=vmem, size = 0x12000, scoped, tag = 'internal scratch']
  %s0 = inlined_call_operand.vmem [shape: f32[2,32], index: 0, kind: input, shape index: {}]
  %s1 = inlined_call_operand.vmem [shape: f32[32,16], index: 1, kind: input, shape index: {}]
  %s2 = inlined_call_operand.hbm [shape: f32[2,16], index: 2, kind: output, shape index: {}]
  %s3 = sld [smem:[#allocation0]]
  $region18: #{tpu_custom_call.1} parent=0
    _
  %s5 = ssub.s32 1, %s3
  %s6 = scalar_select 0, %s5, %s3
  $region1: #{tpu_custom_call.1} parent=0
    #allocation2 [shape = 'u8[1024]{0}', space=vmem, size = 0x400, scoped, tag = 'output window, operand 0, single buffered']
    #allocation3 [shape = 's32[1]{0}', space=sflag, size = 0x4, scoped, tag = 'scoped memory for tpu_custom_call.1']
    %7 = vsyncpa [#allocation3], 0
    // Predicated region
    $region2: #{tpu_custom_call.1} parent=1 // pred_check
      _
    $region3: #{tpu_custom_call.1} parent=1 // pred_check_branch
      %9 = sbr.rel (0) target = $region5
    $region4: #{tpu_custom_call.1} parent=1 // pred_region
      _
    $region5: #{tpu_custom_call.1} parent=1 // pred_fallthru
      _
    // Predicated region
    $region6: #{tpu_custom_call.1} parent=1 // pred_check
      _
    $region7: #{tpu_custom_call.1} parent=1 // pred_check_branch
      %11 = sbr.rel (0) target = $region9
    $region8: #{tpu_custom_call.1} parent=1 // pred_region
      _
    $region9: #{tpu_custom_call.1} parent=1 // pred_fallthru
      _
    %v12 = vld [vmem:[%s0] sm:$0x3]
    %v13 = vld [vmem:[%s1] sm:$0xff]
    %v14 = vld [vmem:[%s1 + $0x8] sm:$0xff]
    %v15 = vld [vmem:[%s1 + $0x10] sm:$0xff]
    %v16 = vld [vmem:[%s1 + $0x18] sm:$0xff]
    %vm17 = vcmask 261120
    %v19 = vsel %vm17, %v12, 0
    %21 = vmatprep.subr.mxu0 0.0
    %22 = vmatpush1.msra.mxu0 %v13
    %23 = vmatprep.subr.mxu0 0.0
    %24 = vmatpush1.msra.mxu0 %v14
    %25 = vmatprep.subr.mxu0 0.0
    %26 = vmatpush1.msra.mxu0 %v15
    %27 = vmatprep.subr.mxu0 0.0
    %28 = vmatpush1.msra.mxu0 %v16
    %29 = vmatprep.subr.mxu0 0.0
    %30 = vmatpush1.msra.mxu0 0.0
    %31 = vmatprep.subr.mxu0 0.0
    %32 = vmatpush1.msra.mxu0 0.0
    %33 = vmatprep.subr.mxu0 0.0
    %34 = vmatpush1.msra.mxu0 0.0
    %35 = vmatprep.subr.mxu0 0.0
    %36 = vmatpush1.msra.mxu0 0.0
    %37 = vmatprep.subr.mxu0 0.0
    %38 = vmatpush1.msra.mxu0 0.0
    %39 = vmatprep.subr.mxu0 0.0
    %40 = vmatpush1.msra.mxu0 0.0
    %41 = vmatprep.subr.mxu0 0.0
    %42 = vmatpush1.msra.mxu0 0.0
    %43 = vmatprep.subr.mxu0 0.0
    %44 = vmatpush1.msra.mxu0 0.0
    %45 = vmatprep.subr.mxu0 0.0
    %46 = vmatpush1.msra.mxu0 0.0
    %47 = vmatprep.subr.mxu0 0.0
    %48 = vmatpush1.msra.mxu0 0.0
    %49 = vmatprep.subr.mxu0 0.0
    %50 = vmatpush1.msra.mxu0 0.0
    %51 = vmatprep.subr.mxu0 0.0
    %52 = vmatpush1.msra.mxu0 0.0
    %53 = vmatprep.subr.mxu0 0.0
    %54 = vmatpush1.msra.mxu0 0.0
    %55 = vmatprep.subr.mxu0 0.0
    %56 = vmatpush1.msra.mxu0 0.0
    %57 = vmatprep.subr.mxu0 0.0
    %58 = vmatpush1.msra.mxu0 0.0
    %59 = vmatprep.subr.mxu0 0.0
    %60 = vmatpush1.msra.mxu0 0.0
    %61 = vmatprep.subr.mxu0 0.0
    %62 = vmatpush1.msra.mxu0 0.0
    %63 = vmatprep.subr.mxu0 0.0
    %64 = vmatpush1.msra.mxu0 0.0
    %65 = vmatprep.subr.mxu0 0.0
    %66 = vmatpush1.msra.mxu0 0.0
    %67 = vmatprep.subr.mxu0 0.0
    %68 = vmatpush1.msra.mxu0 0.0
    %69 = vmatprep.subr.mxu0 0.0
    %70 = vmatpush1.msra.mxu0 0.0
    %71 = vmatprep.subr.mxu0 0.0
    %72 = vmatpush1.msra.mxu0 0.0
    %73 = vmatprep.subr.mxu0 0.0
    %74 = vmatpush1.msra.mxu0 0.0
    %75 = vmatprep.subr.mxu0 0.0
    %76 = vmatpush1.msra.mxu0 0.0
    %77 = vmatprep.subr.mxu0 0.0
    %78 = vmatpush1.msra.mxu0 0.0
    %79 = vmatprep.subr.mxu0 0.0
    %80 = vmatpush1.msra.mxu0 0.0
    %81 = vmatprep.subr.mxu0 0.0
    %82 = vmatpush1.msra.mxu0 0.0
    %83 = vmatprep.subr.mxu0 0.0
    %84 = vmatpush1.msra.mxu0 0.0
    %85 = vmatprep.mubr.f32.mxu0 0.0
    %86 = vmatmul.mubr.f32.gmra.mrb[0].mxu0 %v19
    %v87 = vpop.f32.mrb[0].mxu0
    %v88 = vadd.f32 0.0, %v87
    %v89 = vpop.f32.mrb[0].mxu0
    %90 = vdwg.mxu0
    %vm91 = vcmask 123904
    %92 = vst.msk [vmem:[#allocation2] sm:$0x3] %vm91, %v88
    // Predicated region
    $region10: #{tpu_custom_call.1} parent=1 // pred_check
      _
    $region11: #{tpu_custom_call.1} parent=1 // pred_check_branch
      %94 = sbr.rel (0) target = $region13
    $region12: #{tpu_custom_call.1} parent=1 // pred_region
      %s96 = ssub.s32 32, 32
      %97 = vsyncadd [#allocation3], %s96
      %s99 = sshll.u32 [#allocation2], 4
      %s100 = int_to_ptr.vmem [resolvable:$true] %s99
      %102 = dma.vmem_to_hbm [thread:$0]  %s100, 32, %s2, [#allocation3]
    $region13: #{tpu_custom_call.1} parent=1 // pred_fallthru
      _
    // Predicated region
    $region14: #{tpu_custom_call.1} parent=1 // pred_check
      _
    $region15: #{tpu_custom_call.1} parent=1 // pred_check_branch
      %104 = sbr.rel (0) target = $region17
    $region16: #{tpu_custom_call.1} parent=1 // pred_region
      %105 = dma.done [#allocation3], 32
    $region17: #{tpu_custom_call.1} parent=1 // pred_fallthru
      _
    %106 = vsyncpa [#allocation3], 1

</llo_original>
